<compile_context>
chip_gen: v7x
topology: tpu7x:2x2x1
jax: 0.10.0
libtpu: 0.0.40
codegen_flags: <defaults>
</compile_context>

<pallas_src>
import functools
import math

import jax
import jax.numpy as jnp
import numpy as np
from jax import lax
from jax.experimental import pallas as pl
from jax.experimental.pallas import tpu as pltpu


def eca_kernel_size(in_channel, b=1, gamma=2):
    k = int(abs((math.log(in_channel, 2) + b) / gamma))
    k = k if k % 2 else k + 1
    return k


# ---------------------------------------------------------------------------
# Fused single-pass kernel: pool -> conv1d(channels) -> sigmoid -> rescale.
# ---------------------------------------------------------------------------
def _eca_fused_kernel(w_ref, x_ref, o_ref, *, ksize, hw):
    # x_ref: (TB, C, HW) tile; w_ref: (1, ksize) in SMEM.
    x = x_ref[...]
    tb, C, _ = x.shape
    pad = ksize // 2

    # Global average pool over the spatial lanes; accumulate in f32 without
    # materializing a full f32 copy of the tile.
    pooled = jnp.sum(x, axis=-1, keepdims=True, dtype=jnp.float32) * (1.0 / hw)

    # Conv1d(1, 1, ksize, padding=ksize//2, bias=False) along the channel
    # axis as a static shift-and-add over the taps (cross-correlation).
    if pad:
        zeros = jnp.zeros((tb, pad, 1), jnp.float32)
        padded = jnp.concatenate([zeros, pooled, zeros], axis=1)  # (TB, C+2p, 1)
    else:
        padded = pooled
    y = jnp.zeros((tb, C, 1), jnp.float32)
    for j in range(ksize):
        y = y + w_ref[0, j] * padded[:, j:j + C, :]

    gate = (1.0 / (1.0 + jnp.exp(-y))).astype(x.dtype)   # sigmoid, (TB, C, 1)
    o_ref[...] = (x * gate).astype(o_ref.dtype)          # broadcast over lanes


# ---------------------------------------------------------------------------
# Two-pass fallback kernels (large per-batch slabs / B == 1).
# ---------------------------------------------------------------------------
def _pool_kernel(x_ref, p_ref, *, hw, thw):
    h = pl.program_id(1)

    @pl.when(h == 0)
    def _():
        p_ref[...] = jnp.zeros_like(p_ref)

    x = x_ref[...]                                                # (1, C, THW)
    col = lax.broadcasted_iota(jnp.int32, x.shape, 2) + h * thw
    xm = jnp.where(col < hw, x, jnp.zeros_like(x))                # mask ragged tail
    p_ref[...] += jnp.sum(xm, axis=-1, keepdims=True, dtype=jnp.float32)

    @pl.when(h == pl.num_programs(1) - 1)
    def _():
        p_ref[...] = p_ref[...] * (1.0 / hw)


def _rescale_kernel(g_ref, x_ref, o_ref):
    o_ref[...] = (x_ref[...] * g_ref[...].astype(x_ref.dtype)).astype(o_ref.dtype)


# ---------------------------------------------------------------------------
# Tiling policy.
# ---------------------------------------------------------------------------
def _tpu_vmem_and_target():
    """(physical VMEM bytes, per-step tile byte target)."""
    try:
        vmem = int(pltpu.get_tpu_info().vmem_capacity_bytes)
    except Exception:
        vmem = 64 << 20                     # conservative (v7x-sized) default
    # v7x (64 MiB VMEM, ~3.2 TB/s): bigger steps amortize the ~0.35 us/step
    # overhead.  v5e/v6e (128 MiB): 4 MiB steps already keep overhead <6%.
    target = (8 << 20) if vmem <= (64 << 20) else (4 << 20)
    return vmem, target


def _choose_batch_block(B, per_elem_bytes, target_bytes):
    """Batch rows per grid step: as large as the byte target allows, but
    guaranteeing >=2 grid steps (megacore / pipeline) and preferring >=4 as
    long as each step stays >= ~1 MiB."""
    tb = max(1, min(B, target_bytes // max(per_elem_bytes, 1)))
    for min_steps in (4, 2):
        want = min(B, min_steps)
        if want <= 1:
            break
        cap = -(-B // want)                          # tb giving `want` steps
        if min_steps == 2 or cap * per_elem_bytes >= (1 << 20):
            tb = min(tb, cap)
            break
    return max(1, tb)


def _choose_hw_block(HW, row_bytes, target_bytes, max_hw_block=None):
    thw = max(1, target_bytes // max(row_bytes, 1))
    if max_hw_block is not None:
        thw = min(thw, max_hw_block)
    if thw >= HW:
        return HW
    thw = max(128, (thw // 128) * 128)               # lane-dense blocks
    return min(thw, HW)


# ---------------------------------------------------------------------------
# Wrapper.
# ---------------------------------------------------------------------------
@functools.partial(jax.jit, static_argnames=("ksize", "force_two_pass", "max_hw_block"))
def eca_block_pallas(x, conv_w, ksize, force_two_pass=False, max_hw_block=None):
    B, C, H, W = x.shape
    HW = H * W
    itemsize = jnp.dtype(x.dtype).itemsize
    conv_w = jnp.asarray(conv_w, jnp.float32).reshape(1, ksize)
    xf = x.reshape(B, C, HW)                         # no HBM pad / slice

    phys_vmem, target = _tpu_vmem_and_target()
    vmem_cap = int(phys_vmem * 0.7)                  # headroom for compiler scratch
    headroom = 2 << 20
    per_elem = C * HW * itemsize                     # one batch element's slab

    use_two_pass = (
        force_two_pass
        or 4 * per_elem + headroom > vmem_cap        # fused pipeline cannot fit
        or (B == 1 and per_elem >= 2 * target)       # get parallelism from HW
    )

    if not use_two_pass:
        tb = _choose_batch_block(B, per_elem, target)
        while tb > 1 and 4 * tb * per_elem + headroom > vmem_cap:
            tb -= 1
        block_bytes = tb * per_elem
        vmem_limit = int(min(max(4 * block_bytes + headroom, 16 << 20), vmem_cap))

        cost = pl.CostEstimate(
            flops=int(3 * B * C * HW + 2 * B * C * ksize),
            transcendentals=int(B * C),
            bytes_accessed=int(2 * B * C * HW * itemsize + conv_w.size * 4),
        )
        kern = functools.partial(_eca_fused_kernel, ksize=ksize, hw=HW)
        out = pl.pallas_call(
            kern,
            out_shape=jax.ShapeDtypeStruct((B, C, HW), x.dtype),
            grid_spec=pltpu.PrefetchScalarGridSpec(
                num_scalar_prefetch=0,
                grid=(pl.cdiv(B, tb),),
                in_specs=[
                    # conv weight (1, ksize) -> SMEM, scalar-indexed in kernel
                    pl.BlockSpec(memory_space=pltpu.MemorySpace.SMEM),
                    pl.BlockSpec((tb, C, HW), lambda b: (b, 0, 0)),
                ],
                out_specs=pl.BlockSpec((tb, C, HW), lambda b: (b, 0, 0)),
            ),
            compiler_params=pltpu.CompilerParams(
                dimension_semantics=("parallel",),
                vmem_limit_bytes=vmem_limit,
            ),
            cost_estimate=cost,
        )(conv_w, xf)
        return out.reshape(B, C, H, W)

    # ---- Two-pass fallback: Pallas pooled-reduce over HW blocks, tiny gate
    # ---- in plain XLA, then a Pallas rescale pass (3 HBM passes total). ----
    thw = _choose_hw_block(HW, C * itemsize, target, max_hw_block)
    n_hw = pl.cdiv(HW, thw)
    blk_bytes = C * thw * itemsize
    vmem_limit = int(min(max(4 * blk_bytes + headroom, 16 << 20), vmem_cap))

    pooled = pl.pallas_call(
        functools.partial(_pool_kernel, hw=HW, thw=thw),
        out_shape=jax.ShapeDtypeStruct((B, C, 1), jnp.float32),
        grid_spec=pltpu.PrefetchScalarGridSpec(
            num_scalar_prefetch=0,
            grid=(B, n_hw),
            in_specs=[pl.BlockSpec((1, C, thw), lambda b, h: (b, 0, h))],
            out_specs=pl.BlockSpec((1, C, 1), lambda b, h: (b, 0, 0)),
        ),
        compiler_params=pltpu.CompilerParams(
            dimension_semantics=("parallel", "arbitrary"),
            vmem_limit_bytes=vmem_limit,
        ),
    )(xf)

    # Channel conv + sigmoid on the tiny (B, C) pooled tensor in plain XLA.
    pad = ksize // 2
    p2 = pooled[..., 0]                                            # (B, C)
    padded = jnp.pad(p2, ((0, 0), (pad, pad))) if pad else p2
    y = jnp.zeros_like(p2)
    for j in range(ksize):
        y = y + conv_w[0, j] * padded[:, j:j + C]
    gate = (1.0 / (1.0 + jnp.exp(-y))).astype(x.dtype)[:, :, None]  # (B, C, 1)

    out = pl.pallas_call(
        _rescale_kernel,
        out_shape=jax.ShapeDtypeStruct((B, C, HW), x.dtype),
        grid_spec=pltpu.PrefetchScalarGridSpec(
            num_scalar_prefetch=0,
            grid=(B, n_hw),
            in_specs=[
                pl.BlockSpec((1, C, 1), lambda b, h: (b, 0, 0)),
                pl.BlockSpec((1, C, thw), lambda b, h: (b, 0, h)),
            ],
            out_specs=pl.BlockSpec((1, C, thw), lambda b, h: (b, 0, h)),
        ),
        compiler_params=pltpu.CompilerParams(
            dimension_semantics=("parallel", "parallel"),
            vmem_limit_bytes=vmem_limit,
        ),
    )(gate, xf)
    return out.reshape(B, C, H, W)


def eca_block_ref(x, conv_w, ksize):
    # Pure-JAX reference mirroring the PyTorch forward (f32).
    B, C, H, W = x.shape
    pad = ksize // 2
    pooled = x.mean(axis=(2, 3))                                   # (B, C)
    padded = jnp.pad(pooled, ((0, 0), (pad, pad))) if pad else pooled
    y = sum(conv_w[0, j] * padded[:, j:j + C] for j in range(ksize))
    gate = jax.nn.sigmoid(y)[:, :, None, None]
    return x * gate


if __name__ == "__main__":
    key = jax.random.PRNGKey(0)
    # (shape, dtype, force_two_pass, max_hw_block)
    cases = [
        ((2, 16, 16, 16), jnp.float32, False, None),   # fused, HW=256 lane-aligned
        ((2, 16, 8, 8),   jnp.float32, False, None),   # fused, HW=64 (masked tail store)
        ((2, 16, 16, 16), jnp.bfloat16, False, None),  # fused, bf16 end to end
        ((2, 16, 16, 16), jnp.float32, True, 128),     # two-pass fallback, 2 HW blocks
        ((2, 16, 12, 12), jnp.float32, True, 128),     # two-pass, ragged HW tail
    ]
    for (B, C, H, W), dtype, two_pass, max_hw in cases:
        ksize = eca_kernel_size(C)                     # C=16 -> kernel_size=3
        key, kx, kw = jax.random.split(key, 3)
        x = jax.random.normal(kx, (B, C, H, W), dtype=jnp.float32).astype(dtype)
        # Conv1d(1, 1, k, bias=False) weight is (1, 1, k); stored as (1, k).
        bound = 1.0 / math.sqrt(1 * ksize)
        conv_w = jax.random.uniform(kw, (1, ksize), dtype=jnp.float32,
                                    minval=-bound, maxval=bound)

        ref = eca_block_ref(x.astype(jnp.float32), conv_w, ksize)
        out = eca_block_pallas(x, conv_w, ksize,
                               force_two_pass=two_pass, max_hw_block=max_hw)
        out = jax.block_until_ready(out)

        tol = 2e-2 if dtype == jnp.bfloat16 else 1e-4
        np.testing.assert_allclose(np.asarray(out.astype(jnp.float32)),
                                   np.asarray(ref), rtol=tol, atol=tol)
    print("KERNEL_OK")
</pallas_src>

<mosaic_0001>
module attributes {stable_mosaic.version = 11 : i64} {
  func.func @_eca_fused_kernel(%arg0: i32, %arg1: memref<1x3xf32, #tpu.memory_space<smem>>, %arg2: memref<1x16x256xf32, #tpu.memory_space<vmem>>, %arg3: memref<1x16x256xf32, #tpu.memory_space<vmem>>) attributes {dimension_semantics = [#tpu.dimension_semantics<parallel>], iteration_bounds = array<i64: 2>, scalar_prefetch = 0 : i64, scratch_operands = 0 : i64, tpu.core_type = #tpu.core_type<tc>, window_params = [{transform_indices = @transform_0, window_bounds = array<i64: 1, 3>}, {transform_indices = @transform_1, window_bounds = array<i64: 1, 16, 256>}, {transform_indices = @transform_2, window_bounds = array<i64: 1, 16, 256>}]} {
    %c0 = arith.constant 0 : index
    %c0_0 = arith.constant 0 : index
    %c0_1 = arith.constant 0 : index
    %0 = vector.load %arg2[%c0, %c0_0, %c0_1] : memref<1x16x256xf32, #tpu.memory_space<vmem>>, vector<1x16x256xf32>
    %cst = arith.constant dense<0.000000e+00> : vector<1x16xf32>
    %1 = vector.multi_reduction <add>, %0, %cst [2] : vector<1x16x256xf32> to vector<1x16xf32>
    %2 = vector.shape_cast %1 : vector<1x16xf32> to vector<1x16x1xf32>
    %cst_2 = arith.constant 3.906250e-03 : f32
    %3 = vector.broadcast %cst_2 : f32 to vector<1x16x1xf32>
    %4 = arith.mulf %2, %3 : vector<1x16x1xf32>
    %cst_3 = arith.constant 0.000000e+00 : f32
    %5 = vector.broadcast %cst_3 : f32 to vector<1x1x1xf32>
    %6 = tpu.concatenate %5, %4, %5 in 1 : vector<1x1x1xf32>, vector<1x16x1xf32>, vector<1x1x1xf32> -> vector<1x18x1xf32>
    %cst_4 = arith.constant 0.000000e+00 : f32
    %7 = vector.broadcast %cst_4 : f32 to vector<1x16x1xf32>
    %c0_5 = arith.constant 0 : index
    %c0_6 = arith.constant 0 : index
    %8 = memref.load %arg1[%c0_5, %c0_6] : memref<1x3xf32, #tpu.memory_space<smem>>
    %9 = vector.extract_strided_slice %6 {offsets = [0, 0, 0], sizes = [1, 16, 1], strides = [1, 1, 1]} : vector<1x18x1xf32> to vector<1x16x1xf32>
    %10 = vector.broadcast %8 : f32 to vector<1x16x1xf32>
    %11 = arith.mulf %10, %9 : vector<1x16x1xf32>
    %12 = arith.addf %7, %11 : vector<1x16x1xf32>
    %c0_7 = arith.constant 0 : index
    %c1 = arith.constant 1 : index
    %13 = memref.load %arg1[%c0_7, %c1] : memref<1x3xf32, #tpu.memory_space<smem>>
    %14 = vector.extract_strided_slice %6 {offsets = [0, 1, 0], sizes = [1, 16, 1], strides = [1, 1, 1]} : vector<1x18x1xf32> to vector<1x16x1xf32>
    %15 = vector.broadcast %13 : f32 to vector<1x16x1xf32>
    %16 = arith.mulf %15, %14 : vector<1x16x1xf32>
    %17 = arith.addf %12, %16 : vector<1x16x1xf32>
    %c0_8 = arith.constant 0 : index
    %c2 = arith.constant 2 : index
    %18 = memref.load %arg1[%c0_8, %c2] : memref<1x3xf32, #tpu.memory_space<smem>>
    %19 = vector.extract_strided_slice %6 {offsets = [0, 2, 0], sizes = [1, 16, 1], strides = [1, 1, 1]} : vector<1x18x1xf32> to vector<1x16x1xf32>
    %20 = vector.broadcast %18 : f32 to vector<1x16x1xf32>
    %21 = arith.mulf %20, %19 : vector<1x16x1xf32>
    %22 = arith.addf %17, %21 : vector<1x16x1xf32>
    %cst_9 = arith.constant 0.000000e+00 : f32
    %23 = vector.broadcast %cst_9 : f32 to vector<1x16x1xf32>
    %24 = arith.subf %23, %22 : vector<1x16x1xf32>
    %25 = math.exp %24 : vector<1x16x1xf32>
    %cst_10 = arith.constant 1.000000e+00 : f32
    %26 = vector.broadcast %cst_10 : f32 to vector<1x16x1xf32>
    %27 = arith.addf %26, %25 : vector<1x16x1xf32>
    %cst_11 = arith.constant 1.000000e+00 : f32
    %28 = vector.broadcast %cst_11 : f32 to vector<1x16x1xf32>
    %29 = arith.divf %28, %27 : vector<1x16x1xf32>
    %30 = vector.broadcast %29 : vector<1x16x1xf32> to vector<1x16x256xf32>
    %31 = arith.mulf %0, %30 : vector<1x16x256xf32>
    %c0_12 = arith.constant 0 : index
    %c0_13 = arith.constant 0 : index
    %c0_14 = arith.constant 0 : index
    %32 = vector.load %arg3[%c0_12, %c0_13, %c0_14] : memref<1x16x256xf32, #tpu.memory_space<vmem>>, vector<1x16x256xf32>
    tpu.vector_store %arg3[%c0_12, %c0_13, %c0_14], %31 {strides = array<i32>} : memref<1x16x256xf32, #tpu.memory_space<vmem>>, vector<1x16x256xf32>,
    return
  }
  func.func @transform_0(%arg0: i32) -> (i32, i32) {
    %c0_i32 = arith.constant 0 : i32
    %c0_i32_0 = arith.constant 0 : i32
    %c0_i32_1 = arith.constant 0 : i32
    return %c0_i32, %c0_i32_0 : i32, i32
  }
  func.func @transform_1(%arg0: i32) -> (i32, i32, i32) {
    %c0_i32 = arith.constant 0 : i32
    %c0_i32_0 = arith.constant 0 : i32
    %c0_i32_1 = arith.constant 0 : i32
    return %arg0, %c0_i32, %c0_i32_0 : i32, i32, i32
  }
  func.func @transform_2(%arg0: i32) -> (i32, i32, i32) {
    %c0_i32 = arith.constant 0 : i32
    %c0_i32_0 = arith.constant 0 : i32
    %c0_i32_1 = arith.constant 0 : i32
    return %arg0, %c0_i32, %c0_i32_0 : i32, i32, i32
  }
}

</mosaic_0001>

<llo_original>
// kernel: eca_block_pallas.1
$region0: #{eca_block_pallas.1}
  #allocation0 [shape = 'u32[]', space=smem, size = 0x4, offset = 0x4, fixed_abs, tag = 'smem constant byte address 0x4 - core index']
  #allocation1 [shape = 'u32[144,128]{1,0:T(1,128)}', space=vmem, size = 0x12000, scoped, tag = 'internal scratch']
  %s0 = inlined_call_operand.vmem [shape: f32[1,3], index: 0, kind: input, shape index: {}]
  %s1 = inlined_call_operand.vmem [shape: f32[2,16,256], index: 1, kind: input, shape index: {}]
  %s2 = inlined_call_operand.vmem [shape: f32[2,16,256], index: 2, kind: output, shape index: {}]
  %s3 = sld [smem:[#allocation0]]
  $region45: #{eca_block_pallas.1} parent=0
    _
  %s5 = ssub.s32 1, %s3
  %s6 = scalar_select 0, %s5, %s3
  $region1: #{eca_block_pallas.1} parent=0
    #allocation2 [shape = 'u8[512]{0}', space=smem, size = 0x200, scoped, tag = 'input window, operand 0, single buffered']
    #allocation3 [shape = 's32[2]{0}', space=sflag, size = 0x8, scoped, tag = 'scoped memory for eca_block_pallas.1']
    %7 = vsyncpa [#allocation3], 0
    loop: start=0, step=1, limit=4
    $region2: #{eca_block_pallas.1} parent=1 // loop_pre_header
      _
    $region3: #{eca_block_pallas.1} parent=1 // loop_header
      %s9 = sphi 0, %s13
      %p10 = scmp.ge.s32.totalorder %s9, 4
      %s17 = sphi 0, %s17
      %s19 = sphi 0, %s17
      %s20 = sphi 0, %s19
      %s34 = sphi 0, %s20
      %s40 = sphi 0, %s42
      %s43 = sphi 0, %s40
      %s44 = sphi 0, %s43
      %s60 = sphi 0, %s44
      %s66 = sphi 0, %s68
      %s69 = sphi 0, %s66
      %s70 = sphi 0, %s69
      %s86 = sphi 0, %s70
    $region4: #{eca_block_pallas.1} parent=1 // loop_header_branch
      %12 = sbr.rel (%p10) target = $region8
    $region5: #{eca_block_pallas.1} parent=1 // loop_body
      %s14 = ssub.s32 %s9, 1
      %s15 = ssub.s32 %s9, 2
      %s16 = sadd.s32 %s9, 1
      %s18 = sadd.s32 %s17, 1
      %p21 = scmp.eq.s32.totalorder %s9, 1
      %p22 = scmp.ne.s32.totalorder %s17, %s19
      %p23 = scmp.eq.s32.totalorder %s9, 0
      %p24 = por %p22, %p23
      %p25 = scmp.ne.s32.totalorder %s17, %s19
      %p26 = scmp.eq.s32.totalorder %s14, 1
      %p27 = por %p25, %p26
      %p28 = scmp.ne.s32.totalorder %s19, %s20
      %p29 = scmp.eq.s32.totalorder %s14, 0
      %p30 = por %p28, %p29
      %p31 = scmp.ne.s32.totalorder %s19, %s20
      %p32 = scmp.eq.s32.totalorder %s15, 1
      %p33 = por %p31, %p32
      %p35 = scmp.ne.s32.totalorder %s20, %s34
      %p36 = scmp.eq.s32.totalorder %s15, 0
      %p37 = por %p35, %p36
      %s38 = ssub.s32 %s9, %s16
      %p39 = scmp.eq.s32.totalorder %s38, 0
      %s41 = sadd.s32 %s40, 1
      %s42 = scalar_select %p39, %s40, %s41
      %p45 = pneg %p39
      %p46 = scmp.eq.s32.totalorder %s9, 1
      %p47 = por %p45, %p46
      %p48 = scmp.ne.s32.totalorder %s40, %s43
      %p49 = scmp.eq.s32.totalorder %s9, 0
      %p50 = por %p48, %p49
      %p51 = scmp.ne.s32.totalorder %s40, %s43
      %p52 = scmp.eq.s32.totalorder %s14, 1
      %p53 = por %p51, %p52
      %p54 = scmp.ne.s32.totalorder %s43, %s44
      %p55 = scmp.eq.s32.totalorder %s14, 0
      %p56 = por %p54, %p55
      %p57 = scmp.ne.s32.totalorder %s43, %s44
      %p58 = scmp.eq.s32.totalorder %s15, 1
      %p59 = por %p57, %p58
      %p61 = scmp.ne.s32.totalorder %s44, %s60
      %p62 = scmp.eq.s32.totalorder %s15, 0
      %p63 = por %p61, %p62
      %s64 = ssub.s32 %s9, %s16
      %p65 = scmp.eq.s32.totalorder %s64, 0
      %s67 = sadd.s32 %s66, 1
      %s68 = scalar_select %p65, %s66, %s67
      %p71 = pneg %p65
      %p72 = scmp.eq.s32.totalorder %s9, 1
      %p73 = por %p71, %p72
      %p74 = scmp.ne.s32.totalorder %s66, %s69
      %p75 = scmp.eq.s32.totalorder %s9, 0
      %p76 = por %p74, %p75
      %p77 = scmp.ne.s32.totalorder %s66, %s69
      %p78 = scmp.eq.s32.totalorder %s14, 1
      %p79 = por %p77, %p78
      %p80 = scmp.ne.s32.totalorder %s69, %s70
      %p81 = scmp.eq.s32.totalorder %s14, 0
      %p82 = por %p80, %p81
      %p83 = scmp.ne.s32.totalorder %s69, %s70
      %p84 = scmp.eq.s32.totalorder %s15, 1
      %p85 = por %p83, %p84
      %p87 = scmp.ne.s32.totalorder %s70, %s86
      %p88 = scmp.eq.s32.totalorder %s15, 0
      %p89 = por %p87, %p88
      %p90 = scmp.le.s32.totalorder 1, %s9
      %p91 = scmp.lt.s32.totalorder %s9, 3
      %p92 = pnand %p90, %p91
      %p93 = pneg %p92
      // Predicated region
      $region9: #{eca_block_pallas.1} parent=5 // pred_check
        _
      $region10: #{eca_block_pallas.1} parent=5 // pred_check_branch
        %95 = sbr.rel (%p92) target = $region12
      $region11: #{eca_block_pallas.1} parent=5 // pred_region
        %s96 = ssub.s32 %s9, 1
        // Predicated region
        $region13: #{eca_block_pallas.1} parent=11 // pred_check
          %p97 = pneg %p30
        $region14: #{eca_block_pallas.1} parent=11 // pred_check_branch
          %99 = sbr.rel (%p97) target = $region16
        $region15: #{eca_block_pallas.1} parent=11 // pred_region
          %s101 = ssub.s32 16, 16
          %102 = vsyncadd [#allocation3], %s101
          %s104 = sshll.u32 %s0, 4
          %s105 = int_to_ptr.vmem [resolvable:$true] %s104
          %107 = dma.vmem_to_smem %s105, 16, [#allocation2], [#allocation3]
        $region16: #{eca_block_pallas.1} parent=11 // pred_fallthru
          _
      $region12: #{eca_block_pallas.1} parent=5 // pred_fallthru
        _
      %p108 = scmp.lt.s32.totalorder %s9, 2
      // Predicated region
      $region17: #{eca_block_pallas.1} parent=5 // pred_check
        %p109 = pneg %p108
      $region18: #{eca_block_pallas.1} parent=5 // pred_check_branch
        %111 = sbr.rel (%p109) target = $region20
      $region19: #{eca_block_pallas.1} parent=5 // pred_region
        // Predicated region
        $region21: #{eca_block_pallas.1} parent=19 // pred_check
          %p112 = pneg %p50
        $region22: #{eca_block_pallas.1} parent=19 // pred_check_branch
          %114 = sbr.rel (%p112) target = $region24
        $region23: #{eca_block_pallas.1} parent=19 // pred_region
          %p115 = scmp.lt.s32.totalorder %s9, 1
          %s116 = scalar_select %p115, %s9, 1
          %s117 = smul.addr %s116, 4
          %s118 = smul.addr %s117, 8
          %s119 = scalar_lea.vmem %s1, %s118
        $region24: #{eca_block_pallas.1} parent=19 // pred_fallthru
          _
      $region20: #{eca_block_pallas.1} parent=5 // pred_fallthru
        _
      %p120 = scmp.le.s32.totalorder 1, %s9
      %p121 = scmp.lt.s32.totalorder %s9, 3
      %p122 = pnand %p120, %p121
      %p123 = pneg %p122
      // Predicated region
      $region25: #{eca_block_pallas.1} parent=5 // pred_check
        _
      $region26: #{eca_block_pallas.1} parent=5 // pred_check_branch
        %125 = sbr.rel (%p122) target = $region28
      $region27: #{eca_block_pallas.1} parent=5 // pred_region
        %s126 = ssub.s32 %s9, 1
        // Predicated region
        $region29: #{eca_block_pallas.1} parent=27 // pred_check
          %p127 = pneg %p30
        $region30: #{eca_block_pallas.1} parent=27 // pred_check_branch
          %129 = sbr.rel (%p127) target = $region32
        $region31: #{eca_block_pallas.1} parent=27 // pred_region
          %130 = dma.done [#allocation3], 16
        $region32: #{eca_block_pallas.1} parent=27 // pred_fallthru
          _
        %131 = sfence
        %p132 = pneg %p30
        %p133 = pneg %p27
        %p134 = scmp.lt.s32.totalorder %s14, 1
        %s135 = scalar_select %p134, %s14, 1
        %s136 = smul.addr %s135, 4
        %s137 = smul.addr %s136, 8
        %s138 = scalar_lea.vmem %s1, %s137
        %p139 = pneg %p56
        %p140 = pneg %p53
        %p141 = pneg %p82
        %p142 = pneg %p79
        %p143 = scmp.lt.s32.totalorder %s14, 1
        %s144 = scalar_select %p143, %s14, 1
        %s145 = smul.addr %s144, 4
        %s146 = smul.addr %s145, 8
        %s147 = scalar_lea.vmem %s2, %s146
        %p148 = scmp.lt.s32.totalorder %s14, 1
        %s149 = scalar_select %p148, %s14, 1
        %s150 = smul.addr %s149, 4
        %s151 = smul.addr %s150, 8
        %s152 = scalar_lea.vmem %s1, %s151
        %p153 = scmp.lt.s32.totalorder %s14, 1
        %s154 = scalar_select %p153, %s14, 1
        %s155 = smul.addr %s154, 4
        %s156 = smul.addr %s155, 8
        %s157 = scalar_lea.vmem %s2, %s156
        %v158 = vld [vmem:[%s152] sm:$0xff]
        %v159 = vld [vmem:[%s152 + $0x8] sm:$0xff]
        %v160 = vld [vmem:[%s152 + $0x10] sm:$0xff]
        %v161 = vld [vmem:[%s152 + $0x18] sm:$0xff]
        %v162 = vadd.f32 %v158, %v159
        %163 = vadd.xlane.f32.xlu0 %v162
        %v164 = vpop.xlane.xlu0 %163
        %v165 = vadd.f32 %v160, %v161
        %166 = vadd.xlane.f32.xlu0 %v165
        %v167 = vpop.xlane.xlu0 %166
        %v168 = vmul.f32 %v164, 0.00390625
        %v169 = vmul.f32 %v167, 0.00390625
        %vm172 = vcmask 1040384
        %v173 = vrot.slane %v168, 7
        %v174 = vrot.slane %v169, 7
        %v175 = vsel %vm172, %v173, %v174
        %v179 = vsel %vm172, 0.0, %v173
        %v180 = vsel %vm172, %v174, 0.0
        %s181 = sld [smem:[#allocation2]]
        %v182 = vstv %s181
        %v183 = vmul.f32 %v182, %v179
        %v184 = vmul.f32 %v182, %v175
        %v185 = vadd.f32 %v183, 0.0
        %v186 = vadd.f32 %v184, 0.0
        %s187 = sld [smem:[#allocation2 + $0x1]]
        %v188 = vstv %s187
        %v189 = vmul.f32 %v188, %v179
        %v190 = vmul.f32 %v188, %v175
        %v191 = vmul.f32 %v188, %v180
        %vm195 = vcmask 1046528
        %v196 = vrot.slane %v189, 1
        %v197 = vrot.slane %v190, 1
        %v198 = vsel %vm195, %v196, %v197
        %v199 = vrot.slane %v191, 1
        %v200 = vsel %vm195, %v197, %v199
        %v203 = vadd.f32 %v185, %v198
        %v204 = vadd.f32 %v186, %v200
        %s205 = sld [smem:[#allocation2 + $0x2]]
        %v206 = vstv %s205
        %v207 = vmul.f32 %v206, %v179
        %v208 = vmul.f32 %v206, %v175
        %v209 = vmul.f32 %v206, %v180
        %vm213 = vcmask 1045504
        %v214 = vrot.slane %v207, 2
        %v215 = vrot.slane %v208, 2
        %v216 = vsel %vm213, %v214, %v215
        %v217 = vrot.slane %v209, 2
        %v218 = vsel %vm213, %v215, %v217
        %v221 = vadd.f32 %v203, %v216
        %v222 = vadd.f32 %v204, %v218
        %v223 = vsub.f32 0.0, %v221
        %v224 = vsub.f32 0.0, %v222
        %v225 = vmul.f32 %v223, 1.442695
        %v226 = vpow.pop %v225
        %v227 = vmul.f32 %v224, 1.442695
        %v228 = vpow.pop %v227
        %v229 = vadd.f32 %v226, 1.0
        %v230 = vadd.f32 %v228, 1.0
        %v231 = vrcp.pop %v229
        %v232 = vmul.f32 1.0, %v231
        %v233 = vrcp.pop %v230
        %v234 = vmul.f32 1.0, %v233
        %236 = vset.pattern.permute.xlu0 0
        %237 = vperm.xlu0 %236, %v232
        %v238 = vpop.permute.xlu0 %237
        %241 = vset.pattern.permute.xlu0 0
        %242 = vperm.xlu0 %241, %v234
        %v243 = vpop.permute.xlu0 %242
        %v245 = vmul.f32 %v158, %v238
        %v246 = vmul.f32 %v159, %v238
        %v247 = vmul.f32 %v160, %v243
        %v248 = vmul.f32 %v161, %v243
        %249 = vst [vmem:[%s157] sm:$0xff] %v245
        %250 = vst [vmem:[%s157 + $0x8] sm:$0xff] %v246
        %251 = vst [vmem:[%s157 + $0x10] sm:$0xff] %v247
        %252 = vst [vmem:[%s157 + $0x18] sm:$0xff] %v248
        %p253 = scmp.lt.s32.totalorder %s14, 1
        %s254 = scalar_select %p253, %s14, 1
        %s255 = smul.addr %s254, 4
        %s256 = smul.addr %s255, 8
        %s257 = scalar_lea.vmem %s2, %s256
        // Predicated region
        $region33: #{eca_block_pallas.1} parent=27 // pred_check
          %p258 = pneg %p79
        $region34: #{eca_block_pallas.1} parent=27 // pred_check_branch
          %260 = sbr.rel (%p258) target = $region36
        $region35: #{eca_block_pallas.1} parent=27 // pred_region
          _
        $region36: #{eca_block_pallas.1} parent=27 // pred_fallthru
          _
      $region28: #{eca_block_pallas.1} parent=5 // pred_fallthru
        _
      %p261 = scmp.le.s32.totalorder 2, %s9
      // Predicated region
      $region37: #{eca_block_pallas.1} parent=5 // pred_check
        %p262 = pneg %p261
      $region38: #{eca_block_pallas.1} parent=5 // pred_check_branch
        %264 = sbr.rel (%p262) target = $region40
      $region39: #{eca_block_pallas.1} parent=5 // pred_region
        %s265 = ssub.s32 %s9, 2
        // Predicated region
        $region41: #{eca_block_pallas.1} parent=39 // pred_check
          %p266 = pneg %p85
        $region42: #{eca_block_pallas.1} parent=39 // pred_check_branch
          %268 = sbr.rel (%p266) target = $region44
        $region43: #{eca_block_pallas.1} parent=39 // pred_region
          %p269 = scmp.lt.s32.totalorder %s15, 1
          %s270 = scalar_select %p269, %s15, 1
          %s271 = smul.addr %s270, 4
          %s272 = smul.addr %s271, 8
          %s273 = scalar_lea.vmem %s2, %s272
        $region44: #{eca_block_pallas.1} parent=39 // pred_fallthru
          _
      $region40: #{eca_block_pallas.1} parent=5 // pred_fallthru
        _
    $region6: #{eca_block_pallas.1} parent=1 // loop_footer
      %s13 = sadd.s32 1, %s9
    $region7: #{eca_block_pallas.1} parent=1 // loop_footer_branch
      %8 = sbr.rel target = $region3
    $region8: #{eca_block_pallas.1} parent=1 // loop_exit
      _
    %274 = vsyncpa [#allocation3], 1
    %s275 = scalar_lea.sflag [#allocation3], 1
    %276 = vsyncpa %s275, 1

</llo_original>
